<compile_context>
chip_gen: v6e
topology: v6e:2x2x1
jax: 0.10.0
libtpu: 0.0.40
codegen_flags: <defaults>
</compile_context>

<pallas_src>
import jax
import jax.numpy as jnp
from jax.experimental import pallas as pl
from jax.experimental.pallas import tpu as pltpu

LANE = 128      # lane width: feature padding target for hidden layers
SUB = 8         # sublane granularity: batch tile must be a multiple of this
MAX_TB = 1024   # max batch-tile rows per grid step

SIZES = (1, 50, 100, 50, 1)   # true layer widths of the PyTorch module


def _round_up(n, m):
    return ((n + m - 1) // m) * m


def _pad_to(x, rows, cols):
    r, c = x.shape
    return jnp.pad(x, ((0, rows - r), (0, cols - c)))


def mlp_kernel(x_ref,
               w1_ref, b1_ref,
               w2_ref, b2_ref,
               w3_ref, b3_ref,
               w4_ref, b4_ref,
               o_ref):
    """One batch tile of the fused 4-layer MLP forward."""
    x = x_ref[...]                                             # [TB, 1]

    # Layer 1 (1 -> 50): rank-1 update on the VPU (no MXU pass needed).
    h = x * w1_ref[...] + b1_ref[...]                          # [TB, LANE]
    h = jnp.maximum(h, 0.0)

    # Layer 2 (50 -> 100): MXU, zero-padded 128x128 weights.
    h = jnp.dot(h, w2_ref[...], preferred_element_type=jnp.float32) + b2_ref[...]
    h = jnp.maximum(h, 0.0)

    # Layer 3 (100 -> 50): MXU.
    h = jnp.dot(h, w3_ref[...], preferred_element_type=jnp.float32) + b3_ref[...]
    h = jnp.maximum(h, 0.0)

    # Layer 4 (50 -> 1): lane reduction instead of a 1-column matmul.
    logit = jnp.sum(h * w4_ref[...], axis=-1, keepdims=True) + b4_ref[...]  # [TB, 1]

    # Sigmoid only on the single real output column.
    o_ref[...] = jax.nn.sigmoid(logit)


def prepare_params(params):
    """Transpose / pad PyTorch-convention params once, outside the forward.

    params[f"linear{i}"] = (w, b) with w: [out, in], b: [out].
    Returns the tuple of padded arrays expected by mlp_kernel.
    """
    w1, b1 = params["linear1"]   # [50, 1],   [50]
    w2, b2 = params["linear2"]   # [100, 50], [100]
    w3, b3 = params["linear3"]   # [50, 100], [50]
    w4, b4 = params["linear4"]   # [1, 50],   [1]

    w1_row = _pad_to(jnp.transpose(w1).astype(jnp.float32), 1, LANE)    # [1, 128]
    b1_row = _pad_to(b1.astype(jnp.float32)[None, :], 1, LANE)          # [1, 128]
    w2_p = _pad_to(jnp.transpose(w2).astype(jnp.float32), LANE, LANE)   # [128, 128]
    b2_row = _pad_to(b2.astype(jnp.float32)[None, :], 1, LANE)          # [1, 128]
    w3_p = _pad_to(jnp.transpose(w3).astype(jnp.float32), LANE, LANE)   # [128, 128]
    b3_row = _pad_to(b3.astype(jnp.float32)[None, :], 1, LANE)          # [1, 128]
    w4_row = _pad_to(w4.astype(jnp.float32), 1, LANE)                   # [1, 128] (row of output weights)
    b4_sc = b4.astype(jnp.float32).reshape(1, 1)                        # [1, 1]

    return (w1_row, b1_row, w2_p, b2_row, w3_p, b3_row, w4_row, b4_sc)


@jax.jit
def mlp_forward(x, padded_params):
    """x: [B, 1] float32. padded_params: output of prepare_params.
    Returns [B, 1] float32 in (0, 1)."""
    B = x.shape[0]
    TB = min(MAX_TB, _round_up(B, SUB))       # batch tile (multiple of 8 sublanes)
    Bp = _round_up(B, TB)                     # padded batch, multiple of TB
    grid = (Bp // TB,)

    x_p = jnp.pad(x.astype(jnp.float32), ((0, Bp - B), (0, 0)))   # [Bp, 1]

    w1, b1, w2, b2, w3, b3, w4, b4 = padded_params
    const2 = lambda i: (0, 0)                 # weights/biases stay resident

    out_p = pl.pallas_call(
        mlp_kernel,
        out_shape=jax.ShapeDtypeStruct((Bp, 1), jnp.float32),
        grid=grid,
        in_specs=[
            pl.BlockSpec((TB, 1), lambda i: (i, 0)),      # x: batch-tiled
            pl.BlockSpec((1, LANE), const2),              # w1 row
            pl.BlockSpec((1, LANE), const2),              # b1
            pl.BlockSpec((LANE, LANE), const2),           # w2
            pl.BlockSpec((1, LANE), const2),              # b2
            pl.BlockSpec((LANE, LANE), const2),           # w3
            pl.BlockSpec((1, LANE), const2),              # b3
            pl.BlockSpec((1, LANE), const2),              # w4 row
            pl.BlockSpec((1, 1), const2),                 # b4 scalar
        ],
        out_specs=pl.BlockSpec((TB, 1), lambda i: (i, 0)),
        compiler_params=pltpu.CompilerParams(
            dimension_semantics=("parallel",)),            # megacore on v7x
    )(x_p, w1, b1, w2, b2, w3, b3, w4, b4)

    return out_p[:B]


def init_params(key):
    """Deterministic init mimicking PyTorch nn.Linear default (uniform
    +/- 1/sqrt(fan_in)) for shapes: (50,1), (100,50), (50,100), (1,50)."""
    params = {}
    for i, (fan_in, fan_out) in enumerate(zip(SIZES[:-1], SIZES[1:]), start=1):
        key, kw, kb = jax.random.split(key, 3)
        bound = 1.0 / jnp.sqrt(jnp.float32(fan_in))
        w = jax.random.uniform(kw, (fan_out, fan_in), jnp.float32, -bound, bound)
        b = jax.random.uniform(kb, (fan_out,), jnp.float32, -bound, bound)
        params[f"linear{i}"] = (w, b)
    return params


def mlp_reference(x, params):
    """Pure-JAX reference of the PyTorch forward, for sanity checking."""
    h = x.astype(jnp.float32)
    for i in range(1, 5):
        w, b = params[f"linear{i}"]
        h = h @ w.T + b
        if i < 4:
            h = jnp.maximum(h, 0.0)
    return jax.nn.sigmoid(h)


if __name__ == "__main__":
    key = jax.random.PRNGKey(0)
    key, kx1, kx2 = jax.random.split(key, 3)

    params = init_params(key)
    padded = prepare_params(params)

    # Small case: single grid step.
    x_small = jax.random.normal(kx1, (64, 1), jnp.float32)
    out_small = jax.block_until_ready(mlp_forward(x_small, padded))
    ref_small = mlp_reference(x_small, params)
    assert out_small.shape == (64, 1)
    assert jnp.allclose(out_small, ref_small, atol=1e-5, rtol=1e-5)

    # Larger, non-multiple batch: exercises batch padding + multi-step grid.
    x_big = jax.random.normal(kx2, (2000, 1), jnp.float32)
    out_big = jax.block_until_ready(mlp_forward(x_big, padded))
    ref_big = mlp_reference(x_big, params)
    assert out_big.shape == (2000, 1)
    assert jnp.allclose(out_big, ref_big, atol=1e-5, rtol=1e-5)

    print("KERNEL_OK")
</pallas_src>

<mosaic_0001>
module attributes {stable_mosaic.version = 11 : i64} {
  func.func @mlp_kernel(%arg0: i32, %arg1: memref<64x1xf32, #tpu.memory_space<vmem>>, %arg2: memref<1x128xf32, #tpu.memory_space<vmem>>, %arg3: memref<1x128xf32, #tpu.memory_space<vmem>>, %arg4: memref<128x128xf32, #tpu.memory_space<vmem>>, %arg5: memref<1x128xf32, #tpu.memory_space<vmem>>, %arg6: memref<128x128xf32, #tpu.memory_space<vmem>>, %arg7: memref<1x128xf32, #tpu.memory_space<vmem>>, %arg8: memref<1x128xf32, #tpu.memory_space<vmem>>, %arg9: memref<1x1xf32, #tpu.memory_space<vmem>>, %arg10: memref<64x1xf32, #tpu.memory_space<vmem>>) attributes {dimension_semantics = [#tpu.dimension_semantics<parallel>], iteration_bounds = array<i64: 1>, scalar_prefetch = 0 : i64, scratch_operands = 0 : i64, tpu.core_type = #tpu.core_type<tc>, window_params = [{transform_indices = @transform_0, window_bounds = array<i64: 64, 1>}, {pipeline_mode = #tpu.pipeline_mode<synchronous>, transform_indices = @transform_1, window_bounds = array<i64: 1, 128>}, {pipeline_mode = #tpu.pipeline_mode<synchronous>, transform_indices = @transform_2, window_bounds = array<i64: 1, 128>}, {pipeline_mode = #tpu.pipeline_mode<synchronous>, transform_indices = @transform_3, window_bounds = array<i64: 128, 128>}, {pipeline_mode = #tpu.pipeline_mode<synchronous>, transform_indices = @transform_4, window_bounds = array<i64: 1, 128>}, {pipeline_mode = #tpu.pipeline_mode<synchronous>, transform_indices = @transform_5, window_bounds = array<i64: 128, 128>}, {pipeline_mode = #tpu.pipeline_mode<synchronous>, transform_indices = @transform_6, window_bounds = array<i64: 1, 128>}, {pipeline_mode = #tpu.pipeline_mode<synchronous>, transform_indices = @transform_7, window_bounds = array<i64: 1, 128>}, {pipeline_mode = #tpu.pipeline_mode<synchronous>, transform_indices = @transform_8, window_bounds = array<i64: 1, 1>}, {transform_indices = @transform_9, window_bounds = array<i64: 64, 1>}]} {
    %c0 = arith.constant 0 : index
    %c0_0 = arith.constant 0 : index
    %0 = vector.load %arg1[%c0, %c0_0] : memref<64x1xf32, #tpu.memory_space<vmem>>, vector<64x1xf32>
    %c0_1 = arith.constant 0 : index
    %c0_2 = arith.constant 0 : index
    %1 = vector.load %arg2[%c0_1, %c0_2] : memref<1x128xf32, #tpu.memory_space<vmem>>, vector<1x128xf32>
    %2 = vector.broadcast %0 : vector<64x1xf32> to vector<64x128xf32>
    %3 = vector.broadcast %1 : vector<1x128xf32> to vector<64x128xf32>
    %4 = arith.mulf %2, %3 : vector<64x128xf32>
    %c0_3 = arith.constant 0 : index
    %c0_4 = arith.constant 0 : index
    %5 = vector.load %arg3[%c0_3, %c0_4] : memref<1x128xf32, #tpu.memory_space<vmem>>, vector<1x128xf32>
    %6 = vector.broadcast %5 : vector<1x128xf32> to vector<64x128xf32>
    %7 = arith.addf %4, %6 : vector<64x128xf32>
    %cst = arith.constant 0.000000e+00 : f32
    %8 = vector.broadcast %cst : f32 to vector<64x128xf32>
    %9 = arith.maximumf %7, %8 : vector<64x128xf32>
    %c0_5 = arith.constant 0 : index
    %c0_6 = arith.constant 0 : index
    %10 = vector.load %arg4[%c0_5, %c0_6] : memref<128x128xf32, #tpu.memory_space<vmem>>, vector<128x128xf32>
    %cst_7 = arith.constant dense<0.000000e+00> : vector<64x128xf32>
    %11 = tpu.matmul %9, %10, %cst_7 {dimension_numbers = #tpu.dot_dimension_numbers<[1], [0], [0], [1], [0, 0, 1, 1], [], []>} : vector<64x128xf32>, vector<128x128xf32>, vector<64x128xf32> -> vector<64x128xf32>
    %c0_8 = arith.constant 0 : index
    %c0_9 = arith.constant 0 : index
    %12 = vector.load %arg5[%c0_8, %c0_9] : memref<1x128xf32, #tpu.memory_space<vmem>>, vector<1x128xf32>
    %13 = vector.broadcast %12 : vector<1x128xf32> to vector<64x128xf32>
    %14 = arith.addf %11, %13 : vector<64x128xf32>
    %cst_10 = arith.constant 0.000000e+00 : f32
    %15 = vector.broadcast %cst_10 : f32 to vector<64x128xf32>
    %16 = arith.maximumf %14, %15 : vector<64x128xf32>
    %c0_11 = arith.constant 0 : index
    %c0_12 = arith.constant 0 : index
    %17 = vector.load %arg6[%c0_11, %c0_12] : memref<128x128xf32, #tpu.memory_space<vmem>>, vector<128x128xf32>
    %cst_13 = arith.constant dense<0.000000e+00> : vector<64x128xf32>
    %18 = tpu.matmul %16, %17, %cst_13 {dimension_numbers = #tpu.dot_dimension_numbers<[1], [0], [0], [1], [0, 0, 1, 1], [], []>} : vector<64x128xf32>, vector<128x128xf32>, vector<64x128xf32> -> vector<64x128xf32>
    %c0_14 = arith.constant 0 : index
    %c0_15 = arith.constant 0 : index
    %19 = vector.load %arg7[%c0_14, %c0_15] : memref<1x128xf32, #tpu.memory_space<vmem>>, vector<1x128xf32>
    %20 = vector.broadcast %19 : vector<1x128xf32> to vector<64x128xf32>
    %21 = arith.addf %18, %20 : vector<64x128xf32>
    %cst_16 = arith.constant 0.000000e+00 : f32
    %22 = vector.broadcast %cst_16 : f32 to vector<64x128xf32>
    %23 = arith.maximumf %21, %22 : vector<64x128xf32>
    %c0_17 = arith.constant 0 : index
    %c0_18 = arith.constant 0 : index
    %24 = vector.load %arg8[%c0_17, %c0_18] : memref<1x128xf32, #tpu.memory_space<vmem>>, vector<1x128xf32>
    %25 = vector.broadcast %24 : vector<1x128xf32> to vector<64x128xf32>
    %26 = arith.mulf %23, %25 : vector<64x128xf32>
    %cst_19 = arith.constant dense<0.000000e+00> : vector<64xf32>
    %27 = vector.multi_reduction <add>, %26, %cst_19 [1] : vector<64x128xf32> to vector<64xf32>
    %28 = vector.shape_cast %27 : vector<64xf32> to vector<64x1xf32>
    %c0_20 = arith.constant 0 : index
    %c0_21 = arith.constant 0 : index
    %29 = vector.load %arg9[%c0_20, %c0_21] : memref<1x1xf32, #tpu.memory_space<vmem>>, vector<1x1xf32>
    %30 = vector.broadcast %29 : vector<1x1xf32> to vector<64x1xf32>
    %31 = arith.addf %28, %30 : vector<64x1xf32>
    %32 = arith.negf %31 : vector<64x1xf32>
    %33 = math.exp %32 : vector<64x1xf32>
    %cst_22 = arith.constant 1.000000e+00 : f32
    %34 = vector.broadcast %cst_22 : f32 to vector<64x1xf32>
    %35 = arith.addf %34, %33 : vector<64x1xf32>
    %36 = arith.divf %34, %35 : vector<64x1xf32>
    %c0_23 = arith.constant 0 : index
    %c0_24 = arith.constant 0 : index
    %37 = vector.load %arg10[%c0_23, %c0_24] : memref<64x1xf32, #tpu.memory_space<vmem>>, vector<64x1xf32>
    tpu.vector_store %arg10[%c0_23, %c0_24], %36 {strides = array<i32>} : memref<64x1xf32, #tpu.memory_space<vmem>>, vector<64x1xf32>,
    return
  }
  func.func @transform_0(%arg0: i32) -> (i32, i32) {
    %c0_i32 = arith.constant 0 : i32
    %c0_i32_0 = arith.constant 0 : i32
    return %arg0, %c0_i32 : i32, i32
  }
  func.func @transform_1(%arg0: i32) -> (i32, i32) {
    %c0_i32 = arith.constant 0 : i32
    %c0_i32_0 = arith.constant 0 : i32
    %c0_i32_1 = arith.constant 0 : i32
    return %c0_i32, %c0_i32_0 : i32, i32
  }
  func.func @transform_2(%arg0: i32) -> (i32, i32) {
    %c0_i32 = arith.constant 0 : i32
    %c0_i32_0 = arith.constant 0 : i32
    %c0_i32_1 = arith.constant 0 : i32
    return %c0_i32, %c0_i32_0 : i32, i32
  }
  func.func @transform_3(%arg0: i32) -> (i32, i32) {
    %c0_i32 = arith.constant 0 : i32
    %c0_i32_0 = arith.constant 0 : i32
    %c0_i32_1 = arith.constant 0 : i32
    return %c0_i32, %c0_i32_0 : i32, i32
  }
  func.func @transform_4(%arg0: i32) -> (i32, i32) {
    %c0_i32 = arith.constant 0 : i32
    %c0_i32_0 = arith.constant 0 : i32
    %c0_i32_1 = arith.constant 0 : i32
    return %c0_i32, %c0_i32_0 : i32, i32
  }
  func.func @transform_5(%arg0: i32) -> (i32, i32) {
    %c0_i32 = arith.constant 0 : i32
    %c0_i32_0 = arith.constant 0 : i32
    %c0_i32_1 = arith.constant 0 : i32
    return %c0_i32, %c0_i32_0 : i32, i32
  }
  func.func @transform_6(%arg0: i32) -> (i32, i32) {
    %c0_i32 = arith.constant 0 : i32
    %c0_i32_0 = arith.constant 0 : i32
    %c0_i32_1 = arith.constant 0 : i32
    return %c0_i32, %c0_i32_0 : i32, i32
  }
  func.func @transform_7(%arg0: i32) -> (i32, i32) {
    %c0_i32 = arith.constant 0 : i32
    %c0_i32_0 = arith.constant 0 : i32
    %c0_i32_1 = arith.constant 0 : i32
    return %c0_i32, %c0_i32_0 : i32, i32
  }
  func.func @transform_8(%arg0: i32) -> (i32, i32) {
    %c0_i32 = arith.constant 0 : i32
    %c0_i32_0 = arith.constant 0 : i32
    %c0_i32_1 = arith.constant 0 : i32
    return %c0_i32, %c0_i32_0 : i32, i32
  }
  func.func @transform_9(%arg0: i32) -> (i32, i32) {
    %c0_i32 = arith.constant 0 : i32
    %c0_i32_0 = arith.constant 0 : i32
    return %arg0, %c0_i32 : i32, i32
  }
}

</mosaic_0001>

<llo_original>
// kernel: mlp_forward.1
$region0: #{mlp_forward.1}
  #allocation0 [shape = 'u32[]', space=smem, size = 0x4, offset = 0x4, fixed_abs, tag = 'smem constant byte address 0x4 - core index']
  #allocation1 [shape = 'u32[144,128]{1,0:T(1,128)}', space=vmem, size = 0x12000, scoped, tag = 'internal scratch']
  #allocation2 [shape = 'f32[1,1]{1,0:T(1,128)S(1)}', space=vmem, size = 0x200, scoped, tag = 'scoped memory for mlp_forward.1']
  %s0 = inlined_call_operand.vmem [shape: f32[64,1], index: 0, kind: input, shape index: {}]
  %s1 = inlined_call_operand.vmem [shape: f32[1,128], index: 1, kind: input, shape index: {}]
  %s2 = inlined_call_operand.vmem [shape: f32[1,128], index: 2, kind: input, shape index: {}]
  %s3 = inlined_call_operand.hbm [shape: f32[128,128], index: 3, kind: input, shape index: {}]
  %s4 = inlined_call_operand.vmem [shape: f32[1,128], index: 4, kind: input, shape index: {}]
  %s5 = inlined_call_operand.hbm [shape: f32[128,128], index: 5, kind: input, shape index: {}]
  %s6 = inlined_call_operand.vmem [shape: f32[1,128], index: 6, kind: input, shape index: {}]
  %s7 = inlined_call_operand.vmem [shape: f32[1,128], index: 7, kind: input, shape index: {}]
  %s8 = inlined_call_operand.<no memory space> [shape: f32[1,1], index: 8, kind: input, shape index: {}]
  %s9 = inlined_call_operand.vmem [shape: f32[64,1], index: 9, kind: output, shape index: {}]
  %s10 = sld [smem:[#allocation0]]
  $region54: #{mlp_forward.1} parent=0
    _
  %s12 = ssub.s32 1, %s10
  %s13 = scalar_select 0, %s12, %s10
  %v14 = vstv %s8
  %15 = vst [vmem:[#allocation2] sm:$0x1] %v14
  $region1: #{mlp_forward.1} parent=0
    #allocation3 [shape = 'u8[65536]{0}', space=vmem, size = 0x10000, scoped, tag = 'input window, operand 3, single buffered']
    #allocation4 [shape = 's32[1]{0}', space=sflag, size = 0x4, scoped, tag = 'scoped memory for mlp_forward.1']
    #allocation5 [shape = 'u8[65536]{0}', space=vmem, size = 0x10000, scoped, tag = 'input window, operand 5, single buffered']
    #allocation6 [shape = 's32[1]{0}', space=sflag, size = 0x4, scoped, tag = 'scoped memory for mlp_forward.1']
    %16 = vsyncpa [#allocation4], 0
    %17 = vsyncpa [#allocation6], 0
    // Predicated region
    $region2: #{mlp_forward.1} parent=1 // pred_check
      _
    $region3: #{mlp_forward.1} parent=1 // pred_check_branch
      %19 = sbr.rel (0) target = $region5
    $region4: #{mlp_forward.1} parent=1 // pred_region
      _
    $region5: #{mlp_forward.1} parent=1 // pred_fallthru
      _
    // Predicated region
    $region6: #{mlp_forward.1} parent=1 // pred_check
      _
    $region7: #{mlp_forward.1} parent=1 // pred_check_branch
      %21 = sbr.rel (0) target = $region9
    $region8: #{mlp_forward.1} parent=1 // pred_region
      _
    $region9: #{mlp_forward.1} parent=1 // pred_fallthru
      _
    // Predicated region
    $region10: #{mlp_forward.1} parent=1 // pred_check
      _
    $region11: #{mlp_forward.1} parent=1 // pred_check_branch
      %23 = sbr.rel (0) target = $region13
    $region12: #{mlp_forward.1} parent=1 // pred_region
      _
    $region13: #{mlp_forward.1} parent=1 // pred_fallthru
      _
    // Predicated region
    $region14: #{mlp_forward.1} parent=1 // pred_check
      _
    $region15: #{mlp_forward.1} parent=1 // pred_check_branch
      %25 = sbr.rel (0) target = $region17
    $region16: #{mlp_forward.1} parent=1 // pred_region
      %s27 = ssub.s32 2048, 2048
      %28 = vsyncadd [#allocation4], %s27
      %s29 = sshll.u32 [#allocation3], 4
      %s30 = int_to_ptr.vmem [resolvable:$true] %s29
      %35 = dma.hbm_to_vmem [thread:$0]  %s3, 2048, %s30, [#allocation4], 128, 128, 8
    $region17: #{mlp_forward.1} parent=1 // pred_fallthru
      _
    // Predicated region
    $region18: #{mlp_forward.1} parent=1 // pred_check
      _
    $region19: #{mlp_forward.1} parent=1 // pred_check_branch
      %37 = sbr.rel (0) target = $region21
    $region20: #{mlp_forward.1} parent=1 // pred_region
      _
    $region21: #{mlp_forward.1} parent=1 // pred_fallthru
      _
    // Predicated region
    $region22: #{mlp_forward.1} parent=1 // pred_check
      _
    $region23: #{mlp_forward.1} parent=1 // pred_check_branch
      %39 = sbr.rel (0) target = $region25
    $region24: #{mlp_forward.1} parent=1 // pred_region
      %s41 = ssub.s32 2048, 2048
      %42 = vsyncadd [#allocation6], %s41
      %s43 = sshll.u32 [#allocation5], 4
      %s44 = int_to_ptr.vmem [resolvable:$true] %s43
      %49 = dma.hbm_to_vmem [thread:$0]  %s5, 2048, %s44, [#allocation6], 128, 128, 8
    $region25: #{mlp_forward.1} parent=1 // pred_fallthru
      _
    // Predicated region
    $region26: #{mlp_forward.1} parent=1 // pred_check
      _
    $region27: #{mlp_forward.1} parent=1 // pred_check_branch
      %51 = sbr.rel (0) target = $region29
    $region28: #{mlp_forward.1} parent=1 // pred_region
      _
    $region29: #{mlp_forward.1} parent=1 // pred_fallthru
      _
    // Predicated region
    $region30: #{mlp_forward.1} parent=1 // pred_check
      _
    $region31: #{mlp_forward.1} parent=1 // pred_check_branch
      %53 = sbr.rel (0) target = $region33
    $region32: #{mlp_forward.1} parent=1 // pred_region
      _
    $region33: #{mlp_forward.1} parent=1 // pred_fallthru
      _
    // Predicated region
    $region34: #{mlp_forward.1} parent=1 // pred_check
      _
    $region35: #{mlp_forward.1} parent=1 // pred_check_branch
      %55 = sbr.rel (0) target = $region37
    $region36: #{mlp_forward.1} parent=1 // pred_region
      _
    $region37: #{mlp_forward.1} parent=1 // pred_fallthru
      _
    // Predicated region
    $region38: #{mlp_forward.1} parent=1 // pred_check
      _
    $region39: #{mlp_forward.1} parent=1 // pred_check_branch
      %57 = sbr.rel (0) target = $region41
    $region40: #{mlp_forward.1} parent=1 // pred_region
      %58 = dma.done [#allocation4], 2048
    $region41: #{mlp_forward.1} parent=1 // pred_fallthru
      _
    // Predicated region
    $region42: #{mlp_forward.1} parent=1 // pred_check
      _
    $region43: #{mlp_forward.1} parent=1 // pred_check_branch
      %60 = sbr.rel (0) target = $region45
    $region44: #{mlp_forward.1} parent=1 // pred_region
      %61 = dma.done [#allocation6], 2048
    $region45: #{mlp_forward.1} parent=1 // pred_fallthru
      _
    %v62 = vld [vmem:[%s0] sm:$0xff]
    %v63 = vld [vmem:[%s0 + $0x8] sm:$0xff]
    %v64 = vld [vmem:[%s0 + $0x10] sm:$0xff]
    %v65 = vld [vmem:[%s0 + $0x18] sm:$0xff]
    %v66 = vld [vmem:[%s0 + $0x20] sm:$0xff]
    %v67 = vld [vmem:[%s0 + $0x28] sm:$0xff]
    %v68 = vld [vmem:[%s0 + $0x30] sm:$0xff]
    %v69 = vld [vmem:[%s0 + $0x38] sm:$0xff]
    %v70 = vld [vmem:[%s1] sm:$0x1]
    %72 = vset.pattern.permute.xlu0 0
    %73 = vperm.xlu0 %72, %v62
    %v74 = vpop.permute.xlu0 %73
    %77 = vset.pattern.permute.xlu0 0
    %78 = vperm.xlu0 %77, %v63
    %v79 = vpop.permute.xlu0 %78
    %82 = vset.pattern.permute.xlu0 0
    %83 = vperm.xlu0 %82, %v64
    %v84 = vpop.permute.xlu0 %83
    %87 = vset.pattern.permute.xlu0 0
    %88 = vperm.xlu0 %87, %v65
    %v89 = vpop.permute.xlu0 %88
    %92 = vset.pattern.permute.xlu0 0
    %93 = vperm.xlu0 %92, %v66
    %v94 = vpop.permute.xlu0 %93
    %97 = vset.pattern.permute.xlu0 0
    %98 = vperm.xlu0 %97, %v67
    %v99 = vpop.permute.xlu0 %98
    %102 = vset.pattern.permute.xlu0 0
    %103 = vperm.xlu0 %102, %v68
    %v104 = vpop.permute.xlu0 %103
    %107 = vset.pattern.permute.xlu0 0
    %108 = vperm.xlu0 %107, %v69
    %v109 = vpop.permute.xlu0 %108
    %v112 = vlaneseq
    %v113 = vshrl.u32 %v112, 7
    %v114 = vsub.s32 0, %v113
    %v115 = vrot.slane %v70, %v114
    %v117 = vmul.f32 %v74, %v115
    %v118 = vmul.f32 %v79, %v115
    %v119 = vmul.f32 %v84, %v115
    %v120 = vmul.f32 %v89, %v115
    %v121 = vmul.f32 %v94, %v115
    %v122 = vmul.f32 %v99, %v115
    %v123 = vmul.f32 %v104, %v115
    %v124 = vmul.f32 %v109, %v115
    %v125 = vld [vmem:[%s2] sm:$0x1]
    %v127 = vlaneseq
    %v128 = vshrl.u32 %v127, 7
    %v129 = vsub.s32 0, %v128
    %v130 = vrot.slane %v125, %v129
    %v132 = vadd.f32 %v117, %v130
    %v133 = vadd.f32 %v118, %v130
    %v134 = vadd.f32 %v119, %v130
    %v135 = vadd.f32 %v120, %v130
    %v136 = vadd.f32 %v121, %v130
    %v137 = vadd.f32 %v122, %v130
    %v138 = vadd.f32 %v123, %v130
    %v139 = vadd.f32 %v124, %v130
    %v140 = vmax.f32 %v132, 0.0
    %v141 = vmax.f32 %v133, 0.0
    %v142 = vmax.f32 %v134, 0.0
    %v143 = vmax.f32 %v135, 0.0
    %v144 = vmax.f32 %v136, 0.0
    %v145 = vmax.f32 %v137, 0.0
    %v146 = vmax.f32 %v138, 0.0
    %v147 = vmax.f32 %v139, 0.0
    %v148 = vld [vmem:[#allocation3] sm:$0xff]
    %v149 = vld [vmem:[#allocation3 + $0x8] sm:$0xff]
    %v150 = vld [vmem:[#allocation3 + $0x10] sm:$0xff]
    %v151 = vld [vmem:[#allocation3 + $0x18] sm:$0xff]
    %v152 = vld [vmem:[#allocation3 + $0x20] sm:$0xff]
    %v153 = vld [vmem:[#allocation3 + $0x28] sm:$0xff]
    %v154 = vld [vmem:[#allocation3 + $0x30] sm:$0xff]
    %v155 = vld [vmem:[#allocation3 + $0x38] sm:$0xff]
    %v156 = vld [vmem:[#allocation3 + $0x40] sm:$0xff]
    %v157 = vld [vmem:[#allocation3 + $0x48] sm:$0xff]
    %v158 = vld [vmem:[#allocation3 + $0x50] sm:$0xff]
    %v159 = vld [vmem:[#allocation3 + $0x58] sm:$0xff]
    %v160 = vld [vmem:[#allocation3 + $0x60] sm:$0xff]
    %v161 = vld [vmem:[#allocation3 + $0x68] sm:$0xff]
    %v162 = vld [vmem:[#allocation3 + $0x70] sm:$0xff]
    %v163 = vld [vmem:[#allocation3 + $0x78] sm:$0xff]
    %v164 = vld [vmem:[%s4] sm:$0x1]
    %v166 = vlaneseq
    %v167 = vshrl.u32 %v166, 7
    %v168 = vsub.s32 0, %v167
    %v169 = vrot.slane %v164, %v168
    %171 = vmatprep.subr.mxu0 0.0
    %172 = vmatpush1.msra.mxu0 %v163
    %173 = vmatprep.subr.mxu0 0.0
    %174 = vmatpush1.msra.mxu0 %v162
    %175 = vmatprep.subr.mxu0 0.0
    %176 = vmatpush1.msra.mxu0 %v161
    %177 = vmatprep.subr.mxu0 0.0
    %178 = vmatpush1.msra.mxu0 %v160
    %179 = vmatprep.subr.mxu0 0.0
    %180 = vmatpush1.msra.mxu0 %v159
    %181 = vmatprep.subr.mxu0 0.0
    %182 = vmatpush1.msra.mxu0 %v158
    %183 = vmatprep.subr.mxu0 0.0
    %184 = vmatpush1.msra.mxu0 %v157
    %185 = vmatprep.subr.mxu0 0.0
    %186 = vmatpush1.msra.mxu0 %v156
    %187 = vmatprep.subr.mxu0 0.0
    %188 = vmatpush1.msra.mxu0 %v155
    %189 = vmatprep.subr.mxu0 0.0
    %190 = vmatpush1.msra.mxu0 %v154
    %191 = vmatprep.subr.mxu0 0.0
    %192 = vmatpush1.msra.mxu0 %v153
    %193 = vmatprep.subr.mxu0 0.0
    %194 = vmatpush1.msra.mxu0 %v152
    %195 = vmatprep.subr.mxu0 0.0
    %196 = vmatpush1.msra.mxu0 %v151
    %197 = vmatprep.subr.mxu0 0.0
    %198 = vmatpush1.msra.mxu0 %v150
    %199 = vmatprep.subr.mxu0 0.0
    %200 = vmatpush1.msra.mxu0 %v149
    %201 = vmatprep.subr.mxu0 0.0
    %202 = vmatpush1.msra.mxu0 %v148
    %203 = vmatprep.subr.mxu0 0.0
    %204 = vmatpush2.msra.mxu0 0.0
    %205 = vmatprep.subr.mxu0 0.0
    %206 = vmatpush2.msra.mxu0 0.0
    %207 = vmatprep.subr.mxu0 0.0
    %208 = vmatpush2.msra.mxu0 0.0
    %209 = vmatprep.subr.mxu0 0.0
    %210 = vmatpush2.msra.mxu0 0.0
    %211 = vmatprep.subr.mxu0 0.0
    %212 = vmatpush2.msra.mxu0 0.0
    %213 = vmatprep.subr.mxu0 0.0
    %214 = vmatpush2.msra.mxu0 0.0
    %215 = vmatprep.subr.mxu0 0.0
    %216 = vmatpush2.msra.mxu0 0.0
    %217 = vmatprep.subr.mxu0 0.0
    %218 = vmatpush2.msra.mxu0 0.0
    %219 = vmatprep.subr.mxu0 0.0
    %220 = vmatpush2.msra.mxu0 0.0
    %221 = vmatprep.subr.mxu0 0.0
    %222 = vmatpush2.msra.mxu0 0.0
    %223 = vmatprep.subr.mxu0 0.0
    %224 = vmatpush2.msra.mxu0 0.0
    %225 = vmatprep.subr.mxu0 0.0
    %226 = vmatpush2.msra.mxu0 0.0
    %227 = vmatprep.subr.mxu0 0.0
    %228 = vmatpush2.msra.mxu0 0.0
    %229 = vmatprep.subr.mxu0 0.0
    %230 = vmatpush2.msra.mxu0 0.0
    %231 = vmatprep.subr.mxu0 0.0
    %232 = vmatpush2.msra.mxu0 0.0
    %233 = vmatprep.subr.mxu0 0.0
    %234 = vmatpush2.msra.mxu0 0.0
    %235 = vmatprep.mubr.f32.mxu0 0.0
    %236 = vmatmul.mubr.f32.gmra.mxu0 %v140
    %v237 = vpop.f32.mrf.mxu0
    %v238 = vadd.f32 %v169, %v237
    %v239 = vpop.f32.mrf.mxu0
    %240 = vmatprep.mubr.f32.mxu0 0.0
    %241 = vmatmul.mubr.f32.gmra.mxu0 %v141
    %v242 = vpop.f32.mrf.mxu0
    %v243 = vadd.f32 %v169, %v242
    %v244 = vpop.f32.mrf.mxu0
    %245 = vmatprep.mubr.f32.mxu0 0.0
    %246 = vmatmul.mubr.f32.gmra.mxu0 %v142
    %v247 = vpop.f32.mrf.mxu0
    %v248 = vadd.f32 %v169, %v247
    %v249 = vpop.f32.mrf.mxu0
    %250 = vmatprep.mubr.f32.mxu0 0.0
    %251 = vmatmul.mubr.f32.gmra.mxu0 %v143
    %v252 = vpop.f32.mrf.mxu0
    %v253 = vadd.f32 %v169, %v252
    %v254 = vpop.f32.mrf.mxu0
    %255 = vmatprep.mubr.f32.mxu0 0.0
    %256 = vmatmul.mubr.f32.gmra.mxu0 %v144
    %v257 = vpop.f32.mrf.mxu0
    %v258 = vadd.f32 %v169, %v257
    %v259 = vpop.f32.mrf.mxu0
    %260 = vmatprep.mubr.f32.mxu0 0.0
    %261 = vmatmul.mubr.f32.gmra.mxu0 %v145
    %v262 = vpop.f32.mrf.mxu0
    %v263 = vadd.f32 %v169, %v262
    %v264 = vpop.f32.mrf.mxu0
    %265 = vmatprep.mubr.f32.mxu0 0.0
    %266 = vmatmul.mubr.f32.gmra.mxu0 %v146
    %v267 = vpop.f32.mrf.mxu0
    %v268 = vadd.f32 %v169, %v267
    %v269 = vpop.f32.mrf.mxu0
    %270 = vmatprep.mubr.f32.mxu0 0.0
    %271 = vmatmul.mubr.f32.gmra.mxu0 %v147
    %v272 = vpop.f32.mrf.mxu0
    %v273 = vadd.f32 %v169, %v272
    %v274 = vpop.f32.mrf.mxu0
    %275 = vdwg.mxu0
    %v276 = vmax.f32 %v238, 0.0
    %v277 = vmax.f32 %v243, 0.0
    %v278 = vmax.f32 %v248, 0.0
    %v279 = vmax.f32 %v253, 0.0
    %v280 = vmax.f32 %v258, 0.0
    %v281 = vmax.f32 %v263, 0.0
    %v282 = vmax.f32 %v268, 0.0
    %v283 = vmax.f32 %v273, 0.0
    %v284 = vld [vmem:[#allocation5] sm:$0xff]
    %v285 = vld [vmem:[#allocation5 + $0x8] sm:$0xff]
    %v286 = vld [vmem:[#allocation5 + $0x10] sm:$0xff]
    %v287 = vld [vmem:[#allocation5 + $0x18] sm:$0xff]
    %v288 = vld [vmem:[#allocation5 + $0x20] sm:$0xff]
    %v289 = vld [vmem:[#allocation5 + $0x28] sm:$0xff]
    %v290 = vld [vmem:[#allocation5 + $0x30] sm:$0xff]
    %v291 = vld [vmem:[#allocation5 + $0x38] sm:$0xff]
    %v292 = vld [vmem:[#allocation5 + $0x40] sm:$0xff]
    %v293 = vld [vmem:[#allocation5 + $0x48] sm:$0xff]
    %v294 = vld [vmem:[#allocation5 + $0x50] sm:$0xff]
    %v295 = vld [vmem:[#allocation5 + $0x58] sm:$0xff]
    %v296 = vld [vmem:[#allocation5 + $0x60] sm:$0xff]
    %v297 = vld [vmem:[#allocation5 + $0x68] sm:$0xff]
    %v298 = vld [vmem:[#allocation5 + $0x70] sm:$0xff]
    %v299 = vld [vmem:[#allocation5 + $0x78] sm:$0xff]
    %v300 = vld [vmem:[%s6] sm:$0x1]
    %v302 = vlaneseq
    %v303 = vshrl.u32 %v302, 7
    %v304 = vsub.s32 0, %v303
    %v305 = vrot.slane %v300, %v304
    %307 = vmatprep.subr.mxu0 0.0
    %308 = vmatpush1.msra.mxu0 %v299
    %309 = vmatprep.subr.mxu0 0.0
    %310 = vmatpush1.msra.mxu0 %v298
    %311 = vmatprep.subr.mxu0 0.0
    %312 = vmatpush1.msra.mxu0 %v297
    %313 = vmatprep.subr.mxu0 0.0
    %314 = vmatpush1.msra.mxu0 %v296
    %315 = vmatprep.subr.mxu0 0.0
    %316 = vmatpush1.msra.mxu0 %v295
    %317 = vmatprep.subr.mxu0 0.0
    %318 = vmatpush1.msra.mxu0 %v294
    %319 = vmatprep.subr.mxu0 0.0
    %320 = vmatpush1.msra.mxu0 %v293
    %321 = vmatprep.subr.mxu0 0.0
    %322 = vmatpush1.msra.mxu0 %v292
    %323 = vmatprep.subr.mxu0 0.0
    %324 = vmatpush1.msra.mxu0 %v291
    %325 = vmatprep.subr.mxu0 0.0
    %326 = vmatpush1.msra.mxu0 %v290
    %327 = vmatprep.subr.mxu0 0.0
    %328 = vmatpush1.msra.mxu0 %v289
    %329 = vmatprep.subr.mxu0 0.0
    %330 = vmatpush1.msra.mxu0 %v288
    %331 = vmatprep.subr.mxu0 0.0
    %332 = vmatpush1.msra.mxu0 %v287
    %333 = vmatprep.subr.mxu0 0.0
    %334 = vmatpush1.msra.mxu0 %v286
    %335 = vmatprep.subr.mxu0 0.0
    %336 = vmatpush1.msra.mxu0 %v285
    %337 = vmatprep.subr.mxu0 0.0
    %338 = vmatpush1.msra.mxu0 %v284
    %339 = vmatprep.subr.mxu0 0.0
    %340 = vmatpush2.msra.mxu0 0.0
    %341 = vmatprep.subr.mxu0 0.0
    %342 = vmatpush2.msra.mxu0 0.0
    %343 = vmatprep.subr.mxu0 0.0
    %344 = vmatpush2.msra.mxu0 0.0
    %345 = vmatprep.subr.mxu0 0.0
    %346 = vmatpush2.msra.mxu0 0.0
    %347 = vmatprep.subr.mxu0 0.0
    %348 = vmatpush2.msra.mxu0 0.0
    %349 = vmatprep.subr.mxu0 0.0
    %350 = vmatpush2.msra.mxu0 0.0
    %351 = vmatprep.subr.mxu0 0.0
    %352 = vmatpush2.msra.mxu0 0.0
    %353 = vmatprep.subr.mxu0 0.0
    %354 = vmatpush2.msra.mxu0 0.0
    %355 = vmatprep.subr.mxu0 0.0
    %356 = vmatpush2.msra.mxu0 0.0
    %357 = vmatprep.subr.mxu0 0.0
    %358 = vmatpush2.msra.mxu0 0.0
    %359 = vmatprep.subr.mxu0 0.0
    %360 = vmatpush2.msra.mxu0 0.0
    %361 = vmatprep.subr.mxu0 0.0
    %362 = vmatpush2.msra.mxu0 0.0
    %363 = vmatprep.subr.mxu0 0.0
    %364 = vmatpush2.msra.mxu0 0.0
    %365 = vmatprep.subr.mxu0 0.0
    %366 = vmatpush2.msra.mxu0 0.0
    %367 = vmatprep.subr.mxu0 0.0
    %368 = vmatpush2.msra.mxu0 0.0
    %369 = vmatprep.subr.mxu0 0.0
    %370 = vmatpush2.msra.mxu0 0.0
    %371 = vmatprep.mubr.f32.mxu0 0.0
    %372 = vmatmul.mubr.f32.gmra.mxu0 %v276
    %v373 = vpop.f32.mrf.mxu0
    %v374 = vadd.f32 %v305, %v373
    %v375 = vpop.f32.mrf.mxu0
    %376 = vmatprep.mubr.f32.mxu0 0.0
    %377 = vmatmul.mubr.f32.gmra.mxu0 %v277
    %v378 = vpop.f32.mrf.mxu0
    %v379 = vadd.f32 %v305, %v378
    %v380 = vpop.f32.mrf.mxu0
    %381 = vmatprep.mubr.f32.mxu0 0.0
    %382 = vmatmul.mubr.f32.gmra.mxu0 %v278
    %v383 = vpop.f32.mrf.mxu0
    %v384 = vadd.f32 %v305, %v383
    %v385 = vpop.f32.mrf.mxu0
    %386 = vmatprep.mubr.f32.mxu0 0.0
    %387 = vmatmul.mubr.f32.gmra.mxu0 %v279
    %v388 = vpop.f32.mrf.mxu0
    %v389 = vadd.f32 %v305, %v388
    %v390 = vpop.f32.mrf.mxu0
    %391 = vmatprep.mubr.f32.mxu0 0.0
    %392 = vmatmul.mubr.f32.gmra.mxu0 %v280
    %v393 = vpop.f32.mrf.mxu0
    %v394 = vadd.f32 %v305, %v393
    %v395 = vpop.f32.mrf.mxu0
    %396 = vmatprep.mubr.f32.mxu0 0.0
    %397 = vmatmul.mubr.f32.gmra.mxu0 %v281
    %v398 = vpop.f32.mrf.mxu0
    %v399 = vadd.f32 %v305, %v398
    %v400 = vpop.f32.mrf.mxu0
    %401 = vmatprep.mubr.f32.mxu0 0.0
    %402 = vmatmul.mubr.f32.gmra.mxu0 %v282
    %v403 = vpop.f32.mrf.mxu0
    %v404 = vadd.f32 %v305, %v403
    %v405 = vpop.f32.mrf.mxu0
    %406 = vmatprep.mubr.f32.mxu0 0.0
    %407 = vmatmul.mubr.f32.gmra.mxu0 %v283
    %v408 = vpop.f32.mrf.mxu0
    %v409 = vadd.f32 %v305, %v408
    %v410 = vpop.f32.mrf.mxu0
    %411 = vdwg.mxu0
    %v412 = vmax.f32 %v374, 0.0
    %v413 = vmax.f32 %v379, 0.0
    %v414 = vmax.f32 %v384, 0.0
    %v415 = vmax.f32 %v389, 0.0
    %v416 = vmax.f32 %v394, 0.0
    %v417 = vmax.f32 %v399, 0.0
    %v418 = vmax.f32 %v404, 0.0
    %v419 = vmax.f32 %v409, 0.0
    %v420 = vld [vmem:[%s7] sm:$0x1]
    %v422 = vlaneseq
    %v423 = vshrl.u32 %v422, 7
    %v424 = vsub.s32 0, %v423
    %v425 = vrot.slane %v420, %v424
    %v427 = vmul.f32 %v412, %v425
    %v428 = vmul.f32 %v413, %v425
    %v429 = vmul.f32 %v414, %v425
    %v430 = vmul.f32 %v415, %v425
    %v431 = vmul.f32 %v416, %v425
    %v432 = vmul.f32 %v417, %v425
    %v433 = vmul.f32 %v418, %v425
    %v434 = vmul.f32 %v419, %v425
    %435 = vadd.xlane.f32.xlu0 %v427
    %v436 = vpop.xlane.xlu0 %435
    %437 = vadd.xlane.f32.xlu0 %v428
    %v438 = vpop.xlane.xlu0 %437
    %439 = vadd.xlane.f32.xlu0 %v429
    %v440 = vpop.xlane.xlu0 %439
    %441 = vadd.xlane.f32.xlu0 %v430
    %v442 = vpop.xlane.xlu0 %441
    %443 = vadd.xlane.f32.xlu0 %v431
    %v444 = vpop.xlane.xlu0 %443
    %445 = vadd.xlane.f32.xlu0 %v432
    %v446 = vpop.xlane.xlu0 %445
    %447 = vadd.xlane.f32.xlu0 %v433
    %v448 = vpop.xlane.xlu0 %447
    %449 = vadd.xlane.f32.xlu0 %v434
    %v450 = vpop.xlane.xlu0 %449
    %v451 = vld [vmem:[#allocation2] sm:$0x1]
    %v453 = vlaneseq
    %v454 = vshrl.u32 %v453, 7
    %v455 = vsub.s32 0, %v454
    %v456 = vrot.slane %v451, %v455
    %v458 = vadd.f32 %v436, %v456
    %v459 = vadd.f32 %v438, %v456
    %v460 = vadd.f32 %v440, %v456
    %v461 = vadd.f32 %v442, %v456
    %v462 = vadd.f32 %v444, %v456
    %v463 = vadd.f32 %v446, %v456
    %v464 = vadd.f32 %v448, %v456
    %v465 = vadd.f32 %v450, %v456
    %v466 = vxor.u32 %v458, 2147483648
    %v467 = vxor.u32 %v459, 2147483648
    %v468 = vxor.u32 %v460, 2147483648
    %v469 = vxor.u32 %v461, 2147483648
    %v470 = vxor.u32 %v462, 2147483648
    %v471 = vxor.u32 %v463, 2147483648
    %v472 = vxor.u32 %v464, 2147483648
    %v473 = vxor.u32 %v465, 2147483648
    %v474 = vmul.f32 %v466, 1.442695
    %v475 = vpow.pop %v474
    %v476 = vmul.f32 %v467, 1.442695
    %v477 = vpow.pop %v476
    %v478 = vmul.f32 %v468, 1.442695
    %v479 = vpow.pop %v478
    %v480 = vmul.f32 %v469, 1.442695
    %v481 = vpow.pop %v480
    %v482 = vmul.f32 %v470, 1.442695
    %v483 = vpow.pop %v482
    %v484 = vmul.f32 %v471, 1.442695
    %v485 = vpow.pop %v484
    %v486 = vmul.f32 %v472, 1.442695
    %v487 = vpow.pop %v486
    %v488 = vmul.f32 %v473, 1.442695
    %v489 = vpow.pop %v488
    %v490 = vadd.f32 %v475, 1.0
    %v491 = vadd.f32 %v477, 1.0
    %v492 = vadd.f32 %v479, 1.0
    %v493 = vadd.f32 %v481, 1.0
    %v494 = vadd.f32 %v483, 1.0
    %v495 = vadd.f32 %v485, 1.0
    %v496 = vadd.f32 %v487, 1.0
    %v497 = vadd.f32 %v489, 1.0
    %v498 = vrcp.pop %v490
    %v499 = vmul.f32 1.0, %v498
    %v500 = vrcp.pop %v491
    %v501 = vmul.f32 1.0, %v500
    %v502 = vrcp.pop %v492
    %v503 = vmul.f32 1.0, %v502
    %v504 = vrcp.pop %v493
    %v505 = vmul.f32 1.0, %v504
    %v506 = vrcp.pop %v494
    %v507 = vmul.f32 1.0, %v506
    %v508 = vrcp.pop %v495
    %v509 = vmul.f32 1.0, %v508
    %v510 = vrcp.pop %v496
    %v511 = vmul.f32 1.0, %v510
    %v512 = vrcp.pop %v497
    %v513 = vmul.f32 1.0, %v512
    %vm514 = vcmask 7168
    %515 = vst.msk [vmem:[%s9] sm:$0xff] %vm514, %v499
    %516 = vst.msk [vmem:[%s9 + $0x8] sm:$0xff] %vm514, %v501
    %517 = vst.msk [vmem:[%s9 + $0x10] sm:$0xff] %vm514, %v503
    %518 = vst.msk [vmem:[%s9 + $0x18] sm:$0xff] %vm514, %v505
    %519 = vst.msk [vmem:[%s9 + $0x20] sm:$0xff] %vm514, %v507
    %520 = vst.msk [vmem:[%s9 + $0x28] sm:$0xff] %vm514, %v509
    %521 = vst.msk [vmem:[%s9 + $0x30] sm:$0xff] %vm514, %v511
    %522 = vst.msk [vmem:[%s9 + $0x38] sm:$0xff] %vm514, %v513
    // Predicated region
    $region46: #{mlp_forward.1} parent=1 // pred_check
      _
    $region47: #{mlp_forward.1} parent=1 // pred_check_branch
      %524 = sbr.rel (0) target = $region49
    $region48: #{mlp_forward.1} parent=1 // pred_region
      _
    $region49: #{mlp_forward.1} parent=1 // pred_fallthru
      _
    // Predicated region
    $region50: #{mlp_forward.1} parent=1 // pred_check
      _
    $region51: #{mlp_forward.1} parent=1 // pred_check_branch
      %526 = sbr.rel (0) target = $region53
    $region52: #{mlp_forward.1} parent=1 // pred_region
      _
    $region53: #{mlp_forward.1} parent=1 // pred_fallthru
      _
    %527 = vsyncpa [#allocation4], 1
    %528 = vsyncpa [#allocation6], 1

</llo_original>
